<compile_context>
chip_gen: v5e
topology: v5e:2x2
jax: 0.10.0
libtpu: 0.0.40
codegen_flags: <defaults>
</compile_context>

<pallas_src>
import functools
from typing import NamedTuple

import jax
import jax.numpy as jnp
from jax.experimental import pallas as pl
from jax.experimental.pallas import tpu as pltpu

LN_EPS = 1e-5     # PyTorch nn.LayerNorm default eps
VAR_EPS = 1e-4    # self.var_eps in the module
LANE = 128


class DistParams(NamedTuple):
    loc: jax.Array    # mu
    scale: jax.Array  # temperature * sqrt(exp(var_pre) + var_eps)


class Dims(NamedTuple):
    H: int      # hidden_size (true)
    Dint: int   # intermediate_dim (true)
    Dout: int   # input_dim (true)
    Hp: int     # padded hidden
    Dp: int     # padded intermediate
    Op: int     # padded output


def _round_up(n, m):
    return ((n + m - 1) // m) * m


# ----------------------------- kernel helpers ---------------------------------


def _dot(x, w_ref):
    # bf16 MXU inputs, f32 accumulation.
    return jnp.dot(x.astype(w_ref.dtype), w_ref[...],
                   preferred_element_type=jnp.float32)


def _layernorm_relu(y, n_true):
    """Masked two-pass LayerNorm (no affine) + ReLU along lanes.

    Pre-LN padded lanes of y are exactly zero (zero-padded weight columns + bias), so the
    mean over the full padded width divided by the TRUE count is correct. The centered
    variance masks padded lanes so they do not contribute mean^2 terms; masked `diff` also
    makes the OUTPUT's padded lanes exactly zero.
    """
    n_pad = y.shape[-1]
    inv_n = 1.0 / n_true
    mean = jnp.sum(y, axis=-1, keepdims=True) * inv_n
    diff = y - mean
    if n_pad != n_true:
        lane_ids = jax.lax.broadcasted_iota(jnp.int32, (1, n_pad), 1)
        diff = diff * (lane_ids < n_true).astype(y.dtype)
    var = jnp.sum(diff * diff, axis=-1, keepdims=True) * inv_n
    normed = diff * jax.lax.rsqrt(var + LN_EPS)
    return jnp.maximum(normed, 0.0)          # ReLU; Dropout = identity (eval mode)


# --------------------------------- kernel -------------------------------------


def _vae_decoder_kernel(
    temp_ref,                # SMEM (1,) f32: temperature
    x_ref, eps_ref,          # bf16 activation tiles
    w_mv_ref, b_mv_ref,      # fused [w_mu | w_var], [b_mu | b_var]
    w0_ref, b0_ref,          # decoder initial layer
    w1_ref, b1_ref,          # decoder residual block
    wf_ref, bf_ref,          # decoder final layer
    out_ref,                 # lane-dense slab: [outputs | latents | mu | std]
    *, hidden, inter,
):
    Hp = w_mv_ref.shape[0]   # padded hidden size (static)
    Op = wf_ref.shape[1]     # padded output size (static)
    temp = temp_ref[0]

    x = x_ref[...]
    eps = eps_ref[...].astype(jnp.float32)

    # ---- fused mean/var encoders: one MXU pass over x for both heads --------
    y_mv = _dot(x, w_mv_ref) + b_mv_ref[...]            # (TB, 2*Hp) f32
    mu = _layernorm_relu(y_mv[:, :Hp], hidden)          # padded lanes exactly 0
    var_pre = _layernorm_relu(y_mv[:, Hp:], hidden)     # padded lanes exactly 0

    # ---- reparameterized sample ----------------------------------------------
    var = jnp.exp(var_pre) + VAR_EPS
    std = temp * jnp.sqrt(var)
    # NOTE: std on padded lanes is ~temp*sqrt(1+VAR_EPS) (not 0); latents stay 0 there
    # because mu and eps padded lanes are 0, and the wrapper slices padded lanes off.
    latents = mu + std * eps

    # ---- decoder: initial layer -> residual block -> final linear ------------
    h = _layernorm_relu(_dot(latents, w0_ref) + b0_ref[...], inter)
    h = _layernorm_relu(_dot(h, w1_ref) + b1_ref[...], inter)
    out = _dot(h, wf_ref) + bf_ref[...]

    # ---- direct stores into static 128-aligned lane slices (unmasked vst) ----
    out_ref[:, :Op] = out.astype(out_ref.dtype)
    out_ref[:, Op:Op + Hp] = latents.astype(out_ref.dtype)
    out_ref[:, Op + Hp:Op + 2 * Hp] = mu.astype(out_ref.dtype)
    out_ref[:, Op + 2 * Hp:] = std.astype(out_ref.dtype)


# --------------------------------- wrapper ------------------------------------


def prepare_params(params):
    """Pad feature dims to multiples of 128, fuse the mu/var encoder weights, cast
    weights to bf16 (biases stay f32; they are added after the f32 accumulation)."""
    def pad2(w, rp, cp):
        r, c = w.shape
        return jnp.pad(w, ((0, rp - r), (0, cp - c)))

    H = params["w_mu"].shape[0]
    Dint = params["w0"].shape[1]
    Dout = params["wf"].shape[1]
    Hp, Dp, Op = _round_up(H, LANE), _round_up(Dint, LANE), _round_up(Dout, LANE)

    w_mu = pad2(params["w_mu"], Hp, Hp)
    w_var = pad2(params["w_var"], Hp, Hp)
    b_mu = pad2(params["b_mu"], 1, Hp)
    b_var = pad2(params["b_var"], 1, Hp)

    prepped = dict(
        w_mv=jnp.concatenate([w_mu, w_var], axis=1).astype(jnp.bfloat16),
        b_mv=jnp.concatenate([b_mu, b_var], axis=1).astype(jnp.float32),
        w0=pad2(params["w0"], Hp, Dp).astype(jnp.bfloat16),
        b0=pad2(params["b0"], 1, Dp).astype(jnp.float32),
        w1=pad2(params["w1"], Dp, Dp).astype(jnp.bfloat16),
        b1=pad2(params["b1"], 1, Dp).astype(jnp.float32),
        wf=pad2(params["wf"], Dp, Op).astype(jnp.bfloat16),
        bf=pad2(params["bf"], 1, Op).astype(jnp.float32),
    )
    return prepped, Dims(H=H, Dint=Dint, Dout=Dout, Hp=Hp, Dp=Dp, Op=Op)


def _resident_weight_spec(shape):
    """Constant index_map -> fetched once, stays VMEM-resident across batch tiles.
    Single-buffered (pl.Buffered(1)) so resident weights don't pay a 2x VMEM cost."""
    idx = lambda i: (0, 0)
    if hasattr(pl, "Buffered"):
        try:
            return pl.BlockSpec(shape, idx, pipeline_mode=pl.Buffered(1))
        except TypeError:
            pass
    return pl.BlockSpec(shape, idx)


@functools.partial(jax.jit, static_argnames=("dims", "block_b"))
def custom_vae_decoder(x, eps, prepped, dims, temperature=1.0, block_b=None):
    """x, eps: (B, H) float32. Returns (outputs, latents, DistParams)."""
    B, H = x.shape
    assert H == dims.H
    Hp, Dp, Op = dims.Hp, dims.Dp, dims.Op

    # Batch tiling: aim for >=2 tiles (so "parallel" can shard across both v7x TCs) while
    # keeping padding small; cap at 256 rows (fills the v6e/v7x MXU M dim). Sweepable on v5e.
    if block_b is None:
        block_b = min(256, max(8, _round_up(pl.cdiv(B, 2), 8)))
    Bp = _round_up(B, block_b)
    grid = (Bp // block_b,)

    # bf16 activation streaming: x only feeds the MXU (bf16 anyway); eps is N(0,1) noise.
    xp = jnp.pad(x, ((0, Bp - B), (0, Hp - H))).astype(jnp.bfloat16)
    ep = jnp.pad(eps, ((0, Bp - B), (0, Hp - H))).astype(jnp.bfloat16)
    temp_arr = jnp.full((1,), temperature, jnp.float32)

    slab_w = Op + 3 * Hp   # lane-dense output slab width (multiple of 128)

    def act_spec(width):
        return pl.BlockSpec((block_b, width), lambda i: (i, 0))

    kernel = functools.partial(_vae_decoder_kernel, hidden=dims.H, inter=dims.Dint)

    # ---- VMEM budget: single-buffered weights + double-buffered activation/output tiles ----
    weight_elems = 2 * Hp * Hp + Hp * Dp + Dp * Dp + Dp * Op
    bias_elems = 2 * Hp + 2 * Dp + Op
    wbuf = 1 if hasattr(pl, "Buffered") else 2
    vmem_needed = (
        wbuf * (2 * weight_elems + 4 * bias_elems)   # bf16 weights + f32 biases
        + 2 * (2 * block_b * Hp * 2)                 # x + eps tiles, bf16, double-buffered
        + 2 * (block_b * slab_w * 4)                 # f32 output slab, double-buffered
    )
    vmem_limit = int(min(max(vmem_needed + (4 << 20), 16 << 20), 100 << 20))

    cost = pl.CostEstimate(
        flops=2 * Bp * weight_elems,
        transcendentals=Bp * Hp,                     # exp for the variance
        bytes_accessed=2 * weight_elems + 4 * bias_elems   # weights + biases
        + 2 * (2 * Bp * Hp)                          # bf16 x + eps
        + 4 * Bp * slab_w,                           # f32 output slab
    )

    slab = pl.pallas_call(
        kernel,
        out_shape=jax.ShapeDtypeStruct((Bp, slab_w), jnp.float32),
        grid=grid,
        in_specs=[
            pl.BlockSpec(memory_space=pltpu.MemorySpace.SMEM),   # temperature scalar
            act_spec(Hp),                        # x   (bf16)
            act_spec(Hp),                        # eps (bf16)
            _resident_weight_spec((Hp, 2 * Hp)), # fused w_mu | w_var   (bf16)
            _resident_weight_spec((1, 2 * Hp)),  # fused b_mu | b_var   (f32)
            _resident_weight_spec((Hp, Dp)),     # w0
            _resident_weight_spec((1, Dp)),      # b0
            _resident_weight_spec((Dp, Dp)),     # w1
            _resident_weight_spec((1, Dp)),      # b1
            _resident_weight_spec((Dp, Op)),     # wf
            _resident_weight_spec((1, Op)),      # bf
        ],
        out_specs=pl.BlockSpec((block_b, slab_w), lambda i: (i, 0)),
        compiler_params=pltpu.CompilerParams(
            # batch tiles are independent -> lets v7x shard them across both TensorCores
            dimension_semantics=("parallel",),
            vmem_limit_bytes=vmem_limit,
        ),
        cost_estimate=cost,
    )(
        temp_arr, xp, ep,
        prepped["w_mv"], prepped["b_mv"],
        prepped["w0"], prepped["b0"],
        prepped["w1"], prepped["b1"],
        prepped["wf"], prepped["bf"],
    )

    outputs = slab[:B, :dims.Dout]
    latents = slab[:B, Op:Op + H]
    mu = slab[:B, Op + Hp:Op + Hp + H]
    std = slab[:B, Op + 2 * Hp:Op + 2 * Hp + H]
    return outputs, latents, DistParams(loc=mu, scale=std)


# ------------------------- parameters & pure-JAX reference ---------------------


def init_params(key, hidden_size, input_dim):
    """Deterministic synthetic parameters. Weights stored as (in_dim, out_dim) so the
    kernel computes y = x @ W + b (equivalent to PyTorch's x @ W.T + b)."""
    intermediate = max(hidden_size, input_dim)
    ks = jax.random.split(key, 5)

    def lin(k, d_in, d_out):
        bound = 1.0 / jnp.sqrt(d_in)
        kw, kb = jax.random.split(k)
        w = jax.random.uniform(kw, (d_in, d_out), jnp.float32, -bound, bound)
        b = jax.random.uniform(kb, (1, d_out), jnp.float32, -bound, bound)
        return w, b

    w_mu, b_mu = lin(ks[0], hidden_size, hidden_size)
    w_var, b_var = lin(ks[1], hidden_size, hidden_size)
    w0, b0 = lin(ks[2], hidden_size, intermediate)
    w1, b1 = lin(ks[3], intermediate, intermediate)
    wf, bf = lin(ks[4], intermediate, input_dim)
    return dict(w_mu=w_mu, b_mu=b_mu, w_var=w_var, b_var=b_var,
                w0=w0, b0=b0, w1=w1, b1=b1, wf=wf, bf=bf)


def _reference(x, eps, params, temperature):
    """Pure-JAX f32 reference of the PyTorch module (eval mode)."""
    def ln(y):
        m = jnp.mean(y, axis=-1, keepdims=True)
        v = jnp.mean((y - m) ** 2, axis=-1, keepdims=True)
        return (y - m) * jax.lax.rsqrt(v + LN_EPS)

    def block(h, w, b):
        return jnp.maximum(ln(h @ w + b), 0.0)

    mu = block(x, params["w_mu"], params["b_mu"])
    var = jnp.exp(block(x, params["w_var"], params["b_var"])) + VAR_EPS
    std = temperature * jnp.sqrt(var)
    latents = mu + std * eps
    h = block(latents, params["w0"], params["b0"])
    h = block(h, params["w1"], params["b1"])
    out = h @ params["wf"] + params["bf"]
    return out, latents, mu, std


# ------------------------------------ demo -------------------------------------


if __name__ == "__main__":
    batch = 8
    hidden_size = 32
    input_dim = 16

    key = jax.random.PRNGKey(0)
    k_x, k_eps, k_params = jax.random.split(key, 3)

    x = jax.random.normal(k_x, (batch, hidden_size), jnp.float32)
    eps = jax.random.normal(k_eps, (batch, hidden_size), jnp.float32)  # N(0,1) for rsample
    params = init_params(k_params, hidden_size, input_dim)

    prepped, dims = prepare_params(params)

    outputs, latents, dist = custom_vae_decoder(x, eps, prepped, dims, temperature=1.0)
    jax.block_until_ready((outputs, latents, dist.loc, dist.scale))

    assert outputs.shape == (batch, input_dim)
    assert latents.shape == (batch, hidden_size)
    assert dist.loc.shape == (batch, hidden_size)
    assert dist.scale.shape == (batch, hidden_size)

    # Correctness vs. f32 reference (loose tolerance: kernel uses bf16 weights/inputs on the MXU).
    ref_out, ref_lat, ref_mu, ref_std = _reference(x, eps, params, 1.0)
    for got, want in ((outputs, ref_out), (latents, ref_lat),
                      (dist.loc, ref_mu), (dist.scale, ref_std)):
        assert bool(jnp.all(jnp.isfinite(got)))
        assert bool(jnp.allclose(got, want, atol=1e-1, rtol=1e-1))

    print("KERNEL_OK")
</pallas_src>

<mosaic_0001>
module attributes {stable_mosaic.version = 11 : i64} {
  func.func @_vae_decoder_kernel(%arg0: i32, %arg1: memref<1xf32, #tpu.memory_space<smem>>, %arg2: memref<8x128xbf16, #tpu.memory_space<vmem>>, %arg3: memref<8x128xbf16, #tpu.memory_space<vmem>>, %arg4: memref<128x256xbf16, #tpu.memory_space<vmem>>, %arg5: memref<1x256xf32, #tpu.memory_space<vmem>>, %arg6: memref<128x128xbf16, #tpu.memory_space<vmem>>, %arg7: memref<1x128xf32, #tpu.memory_space<vmem>>, %arg8: memref<128x128xbf16, #tpu.memory_space<vmem>>, %arg9: memref<1x128xf32, #tpu.memory_space<vmem>>, %arg10: memref<128x128xbf16, #tpu.memory_space<vmem>>, %arg11: memref<1x128xf32, #tpu.memory_space<vmem>>, %arg12: memref<8x512xf32, #tpu.memory_space<vmem>>) attributes {dimension_semantics = [#tpu.dimension_semantics<parallel>], iteration_bounds = array<i64: 1>, scalar_prefetch = 0 : i64, scratch_operands = 0 : i64, tpu.core_type = #tpu.core_type<tc>, window_params = [{transform_indices = @transform_0, window_bounds = array<i64: 1>}, {transform_indices = @transform_1, window_bounds = array<i64: 8, 128>}, {transform_indices = @transform_2, window_bounds = array<i64: 8, 128>}, {pipeline_mode = #tpu.pipeline_mode<synchronous>, transform_indices = @transform_3, window_bounds = array<i64: 128, 256>}, {pipeline_mode = #tpu.pipeline_mode<synchronous>, transform_indices = @transform_4, window_bounds = array<i64: 1, 256>}, {pipeline_mode = #tpu.pipeline_mode<synchronous>, transform_indices = @transform_5, window_bounds = array<i64: 128, 128>}, {pipeline_mode = #tpu.pipeline_mode<synchronous>, transform_indices = @transform_6, window_bounds = array<i64: 1, 128>}, {pipeline_mode = #tpu.pipeline_mode<synchronous>, transform_indices = @transform_7, window_bounds = array<i64: 128, 128>}, {pipeline_mode = #tpu.pipeline_mode<synchronous>, transform_indices = @transform_8, window_bounds = array<i64: 1, 128>}, {pipeline_mode = #tpu.pipeline_mode<synchronous>, transform_indices = @transform_9, window_bounds = array<i64: 128, 128>}, {pipeline_mode = #tpu.pipeline_mode<synchronous>, transform_indices = @transform_10, window_bounds = array<i64: 1, 128>}, {transform_indices = @transform_11, window_bounds = array<i64: 8, 512>}]} {
    %c0 = arith.constant 0 : index
    %0 = memref.load %arg1[%c0] : memref<1xf32, #tpu.memory_space<smem>>
    %c0_0 = arith.constant 0 : index
    %c0_1 = arith.constant 0 : index
    %1 = vector.load %arg2[%c0_0, %c0_1] : memref<8x128xbf16, #tpu.memory_space<vmem>>, vector<8x128xbf16>
    %c0_2 = arith.constant 0 : index
    %c0_3 = arith.constant 0 : index
    %2 = vector.load %arg3[%c0_2, %c0_3] : memref<8x128xbf16, #tpu.memory_space<vmem>>, vector<8x128xbf16>
    %3 = arith.extf %2 : vector<8x128xbf16> to vector<8x128xf32>
    %c0_4 = arith.constant 0 : index
    %c0_5 = arith.constant 0 : index
    %4 = vector.load %arg4[%c0_4, %c0_5] : memref<128x256xbf16, #tpu.memory_space<vmem>>, vector<128x256xbf16>
    %cst = arith.constant dense<0.000000e+00> : vector<8x256xf32>
    %5 = tpu.matmul %1, %4, %cst {dimension_numbers = #tpu.dot_dimension_numbers<[1], [0], [0], [1], [0, 0, 1, 1], [], []>} : vector<8x128xbf16>, vector<128x256xbf16>, vector<8x256xf32> -> vector<8x256xf32>
    %c0_6 = arith.constant 0 : index
    %c0_7 = arith.constant 0 : index
    %6 = vector.load %arg5[%c0_6, %c0_7] : memref<1x256xf32, #tpu.memory_space<vmem>>, vector<1x256xf32>
    %7 = vector.broadcast %6 : vector<1x256xf32> to vector<8x256xf32>
    %8 = arith.addf %5, %7 : vector<8x256xf32>
    %9 = vector.extract_strided_slice %8 {offsets = [0, 0], sizes = [8, 128], strides = [1, 1]} : vector<8x256xf32> to vector<8x128xf32>
    %cst_8 = arith.constant dense<0.000000e+00> : vector<8xf32>
    %10 = vector.multi_reduction <add>, %9, %cst_8 [1] : vector<8x128xf32> to vector<8xf32>
    %11 = vector.shape_cast %10 : vector<8xf32> to vector<8x1xf32>
    %cst_9 = arith.constant 3.125000e-02 : f32
    %12 = vector.broadcast %cst_9 : f32 to vector<8x1xf32>
    %13 = arith.mulf %11, %12 : vector<8x1xf32>
    %14 = vector.broadcast %13 : vector<8x1xf32> to vector<8x128xf32>
    %15 = arith.subf %9, %14 : vector<8x128xf32>
    %16 = tpu.iota {dimensions = array<i32: 1>} : vector<1x128xi32>
    %c32_i32 = arith.constant 32 : i32
    %17 = vector.broadcast %c32_i32 : i32 to vector<1x128xi32>
    %18 = arith.cmpi slt, %16, %17 : vector<1x128xi32>
    %19 = arith.extui %18 : vector<1x128xi1> to vector<1x128xi32>
    %20 = arith.sitofp %19 : vector<1x128xi32> to vector<1x128xf32>
    %21 = vector.broadcast %20 : vector<1x128xf32> to vector<8x128xf32>
    %22 = arith.mulf %15, %21 : vector<8x128xf32>
    %23 = arith.mulf %22, %22 : vector<8x128xf32>
    %cst_10 = arith.constant dense<0.000000e+00> : vector<8xf32>
    %24 = vector.multi_reduction <add>, %23, %cst_10 [1] : vector<8x128xf32> to vector<8xf32>
    %25 = vector.shape_cast %24 : vector<8xf32> to vector<8x1xf32>
    %cst_11 = arith.constant 3.125000e-02 : f32
    %26 = vector.broadcast %cst_11 : f32 to vector<8x1xf32>
    %27 = arith.mulf %25, %26 : vector<8x1xf32>
    %cst_12 = arith.constant 9.99999974E-6 : f32
    %28 = vector.broadcast %cst_12 : f32 to vector<8x1xf32>
    %29 = arith.addf %27, %28 : vector<8x1xf32>
    %30 = math.rsqrt %29 : vector<8x1xf32>
    %31 = vector.broadcast %30 : vector<8x1xf32> to vector<8x128xf32>
    %32 = arith.mulf %22, %31 : vector<8x128xf32>
    %cst_13 = arith.constant 0.000000e+00 : f32
    %33 = vector.broadcast %cst_13 : f32 to vector<8x128xf32>
    %34 = arith.maximumf %32, %33 : vector<8x128xf32>
    %35 = vector.extract_strided_slice %8 {offsets = [0, 128], sizes = [8, 128], strides = [1, 1]} : vector<8x256xf32> to vector<8x128xf32>
    %cst_14 = arith.constant dense<0.000000e+00> : vector<8xf32>
    %36 = vector.multi_reduction <add>, %35, %cst_14 [1] : vector<8x128xf32> to vector<8xf32>
    %37 = vector.shape_cast %36 : vector<8xf32> to vector<8x1xf32>
    %cst_15 = arith.constant 3.125000e-02 : f32
    %38 = vector.broadcast %cst_15 : f32 to vector<8x1xf32>
    %39 = arith.mulf %37, %38 : vector<8x1xf32>
    %40 = vector.broadcast %39 : vector<8x1xf32> to vector<8x128xf32>
    %41 = arith.subf %35, %40 : vector<8x128xf32>
    %42 = tpu.iota {dimensions = array<i32: 1>} : vector<1x128xi32>
    %c32_i32_16 = arith.constant 32 : i32
    %43 = vector.broadcast %c32_i32_16 : i32 to vector<1x128xi32>
    %44 = arith.cmpi slt, %42, %43 : vector<1x128xi32>
    %45 = arith.extui %44 : vector<1x128xi1> to vector<1x128xi32>
    %46 = arith.sitofp %45 : vector<1x128xi32> to vector<1x128xf32>
    %47 = vector.broadcast %46 : vector<1x128xf32> to vector<8x128xf32>
    %48 = arith.mulf %41, %47 : vector<8x128xf32>
    %49 = arith.mulf %48, %48 : vector<8x128xf32>
    %cst_17 = arith.constant dense<0.000000e+00> : vector<8xf32>
    %50 = vector.multi_reduction <add>, %49, %cst_17 [1] : vector<8x128xf32> to vector<8xf32>
    %51 = vector.shape_cast %50 : vector<8xf32> to vector<8x1xf32>
    %cst_18 = arith.constant 3.125000e-02 : f32
    %52 = vector.broadcast %cst_18 : f32 to vector<8x1xf32>
    %53 = arith.mulf %51, %52 : vector<8x1xf32>
    %cst_19 = arith.constant 9.99999974E-6 : f32
    %54 = vector.broadcast %cst_19 : f32 to vector<8x1xf32>
    %55 = arith.addf %53, %54 : vector<8x1xf32>
    %56 = math.rsqrt %55 : vector<8x1xf32>
    %57 = vector.broadcast %56 : vector<8x1xf32> to vector<8x128xf32>
    %58 = arith.mulf %48, %57 : vector<8x128xf32>
    %cst_20 = arith.constant 0.000000e+00 : f32
    %59 = vector.broadcast %cst_20 : f32 to vector<8x128xf32>
    %60 = arith.maximumf %58, %59 : vector<8x128xf32>
    %61 = math.exp %60 : vector<8x128xf32>
    %cst_21 = arith.constant 9.99999974E-5 : f32
    %62 = vector.broadcast %cst_21 : f32 to vector<8x128xf32>
    %63 = arith.addf %61, %62 : vector<8x128xf32>
    %64 = math.sqrt %63 : vector<8x128xf32>
    %65 = vector.broadcast %0 : f32 to vector<8x128xf32>
    %66 = arith.mulf %65, %64 : vector<8x128xf32>
    %67 = arith.mulf %66, %3 : vector<8x128xf32>
    %68 = arith.addf %34, %67 : vector<8x128xf32>
    %69 = arith.truncf %68 : vector<8x128xf32> to vector<8x128xbf16>
    %c0_22 = arith.constant 0 : index
    %c0_23 = arith.constant 0 : index
    %70 = vector.load %arg6[%c0_22, %c0_23] : memref<128x128xbf16, #tpu.memory_space<vmem>>, vector<128x128xbf16>
    %cst_24 = arith.constant dense<0.000000e+00> : vector<8x128xf32>
    %71 = tpu.matmul %69, %70, %cst_24 {dimension_numbers = #tpu.dot_dimension_numbers<[1], [0], [0], [1], [0, 0, 1, 1], [], []>} : vector<8x128xbf16>, vector<128x128xbf16>, vector<8x128xf32> -> vector<8x128xf32>
    %c0_25 = arith.constant 0 : index
    %c0_26 = arith.constant 0 : index
    %72 = vector.load %arg7[%c0_25, %c0_26] : memref<1x128xf32, #tpu.memory_space<vmem>>, vector<1x128xf32>
    %73 = vector.broadcast %72 : vector<1x128xf32> to vector<8x128xf32>
    %74 = arith.addf %71, %73 : vector<8x128xf32>
    %cst_27 = arith.constant dense<0.000000e+00> : vector<8xf32>
    %75 = vector.multi_reduction <add>, %74, %cst_27 [1] : vector<8x128xf32> to vector<8xf32>
    %76 = vector.shape_cast %75 : vector<8xf32> to vector<8x1xf32>
    %cst_28 = arith.constant 3.125000e-02 : f32
    %77 = vector.broadcast %cst_28 : f32 to vector<8x1xf32>
    %78 = arith.mulf %76, %77 : vector<8x1xf32>
    %79 = vector.broadcast %78 : vector<8x1xf32> to vector<8x128xf32>
    %80 = arith.subf %74, %79 : vector<8x128xf32>
    %81 = tpu.iota {dimensions = array<i32: 1>} : vector<1x128xi32>
    %c32_i32_29 = arith.constant 32 : i32
    %82 = vector.broadcast %c32_i32_29 : i32 to vector<1x128xi32>
    %83 = arith.cmpi slt, %81, %82 : vector<1x128xi32>
    %84 = arith.extui %83 : vector<1x128xi1> to vector<1x128xi32>
    %85 = arith.sitofp %84 : vector<1x128xi32> to vector<1x128xf32>
    %86 = vector.broadcast %85 : vector<1x128xf32> to vector<8x128xf32>
    %87 = arith.mulf %80, %86 : vector<8x128xf32>
    %88 = arith.mulf %87, %87 : vector<8x128xf32>
    %cst_30 = arith.constant dense<0.000000e+00> : vector<8xf32>
    %89 = vector.multi_reduction <add>, %88, %cst_30 [1] : vector<8x128xf32> to vector<8xf32>
    %90 = vector.shape_cast %89 : vector<8xf32> to vector<8x1xf32>
    %cst_31 = arith.constant 3.125000e-02 : f32
    %91 = vector.broadcast %cst_31 : f32 to vector<8x1xf32>
    %92 = arith.mulf %90, %91 : vector<8x1xf32>
    %cst_32 = arith.constant 9.99999974E-6 : f32
    %93 = vector.broadcast %cst_32 : f32 to vector<8x1xf32>
    %94 = arith.addf %92, %93 : vector<8x1xf32>
    %95 = math.rsqrt %94 : vector<8x1xf32>
    %96 = vector.broadcast %95 : vector<8x1xf32> to vector<8x128xf32>
    %97 = arith.mulf %87, %96 : vector<8x128xf32>
    %cst_33 = arith.constant 0.000000e+00 : f32
    %98 = vector.broadcast %cst_33 : f32 to vector<8x128xf32>
    %99 = arith.maximumf %97, %98 : vector<8x128xf32>
    %100 = arith.truncf %99 : vector<8x128xf32> to vector<8x128xbf16>
    %c0_34 = arith.constant 0 : index
    %c0_35 = arith.constant 0 : index
    %101 = vector.load %arg8[%c0_34, %c0_35] : memref<128x128xbf16, #tpu.memory_space<vmem>>, vector<128x128xbf16>
    %cst_36 = arith.constant dense<0.000000e+00> : vector<8x128xf32>
    %102 = tpu.matmul %100, %101, %cst_36 {dimension_numbers = #tpu.dot_dimension_numbers<[1], [0], [0], [1], [0, 0, 1, 1], [], []>} : vector<8x128xbf16>, vector<128x128xbf16>, vector<8x128xf32> -> vector<8x128xf32>
    %c0_37 = arith.constant 0 : index
    %c0_38 = arith.constant 0 : index
    %103 = vector.load %arg9[%c0_37, %c0_38] : memref<1x128xf32, #tpu.memory_space<vmem>>, vector<1x128xf32>
    %104 = vector.broadcast %103 : vector<1x128xf32> to vector<8x128xf32>
    %105 = arith.addf %102, %104 : vector<8x128xf32>
    %cst_39 = arith.constant dense<0.000000e+00> : vector<8xf32>
    %106 = vector.multi_reduction <add>, %105, %cst_39 [1] : vector<8x128xf32> to vector<8xf32>
    %107 = vector.shape_cast %106 : vector<8xf32> to vector<8x1xf32>
    %cst_40 = arith.constant 3.125000e-02 : f32
    %108 = vector.broadcast %cst_40 : f32 to vector<8x1xf32>
    %109 = arith.mulf %107, %108 : vector<8x1xf32>
    %110 = vector.broadcast %109 : vector<8x1xf32> to vector<8x128xf32>
    %111 = arith.subf %105, %110 : vector<8x128xf32>
    %112 = tpu.iota {dimensions = array<i32: 1>} : vector<1x128xi32>
    %c32_i32_41 = arith.constant 32 : i32
    %113 = vector.broadcast %c32_i32_41 : i32 to vector<1x128xi32>
    %114 = arith.cmpi slt, %112, %113 : vector<1x128xi32>
    %115 = arith.extui %114 : vector<1x128xi1> to vector<1x128xi32>
    %116 = arith.sitofp %115 : vector<1x128xi32> to vector<1x128xf32>
    %117 = vector.broadcast %116 : vector<1x128xf32> to vector<8x128xf32>
    %118 = arith.mulf %111, %117 : vector<8x128xf32>
    %119 = arith.mulf %118, %118 : vector<8x128xf32>
    %cst_42 = arith.constant dense<0.000000e+00> : vector<8xf32>
    %120 = vector.multi_reduction <add>, %119, %cst_42 [1] : vector<8x128xf32> to vector<8xf32>
    %121 = vector.shape_cast %120 : vector<8xf32> to vector<8x1xf32>
    %cst_43 = arith.constant 3.125000e-02 : f32
    %122 = vector.broadcast %cst_43 : f32 to vector<8x1xf32>
    %123 = arith.mulf %121, %122 : vector<8x1xf32>
    %cst_44 = arith.constant 9.99999974E-6 : f32
    %124 = vector.broadcast %cst_44 : f32 to vector<8x1xf32>
    %125 = arith.addf %123, %124 : vector<8x1xf32>
    %126 = math.rsqrt %125 : vector<8x1xf32>
    %127 = vector.broadcast %126 : vector<8x1xf32> to vector<8x128xf32>
    %128 = arith.mulf %118, %127 : vector<8x128xf32>
    %cst_45 = arith.constant 0.000000e+00 : f32
    %129 = vector.broadcast %cst_45 : f32 to vector<8x128xf32>
    %130 = arith.maximumf %128, %129 : vector<8x128xf32>
    %131 = arith.truncf %130 : vector<8x128xf32> to vector<8x128xbf16>
    %c0_46 = arith.constant 0 : index
    %c0_47 = arith.constant 0 : index
    %132 = vector.load %arg10[%c0_46, %c0_47] : memref<128x128xbf16, #tpu.memory_space<vmem>>, vector<128x128xbf16>
    %cst_48 = arith.constant dense<0.000000e+00> : vector<8x128xf32>
    %133 = tpu.matmul %131, %132, %cst_48 {dimension_numbers = #tpu.dot_dimension_numbers<[1], [0], [0], [1], [0, 0, 1, 1], [], []>} : vector<8x128xbf16>, vector<128x128xbf16>, vector<8x128xf32> -> vector<8x128xf32>
    %c0_49 = arith.constant 0 : index
    %c0_50 = arith.constant 0 : index
    %134 = vector.load %arg11[%c0_49, %c0_50] : memref<1x128xf32, #tpu.memory_space<vmem>>, vector<1x128xf32>
    %135 = vector.broadcast %134 : vector<1x128xf32> to vector<8x128xf32>
    %136 = arith.addf %133, %135 : vector<8x128xf32>
    %c0_51 = arith.constant 0 : index
    %c0_52 = arith.constant 0 : index
    %137 = vector.load %arg12[%c0_51, %c0_52] : memref<8x512xf32, #tpu.memory_space<vmem>>, vector<8x128xf32>
    tpu.vector_store %arg12[%c0_51, %c0_52], %136 {strides = array<i32>} : memref<8x512xf32, #tpu.memory_space<vmem>>, vector<8x128xf32>,
    %c0_53 = arith.constant 0 : index
    %c128 = arith.constant 128 : index
    %138 = vector.load %arg12[%c0_53, %c128] : memref<8x512xf32, #tpu.memory_space<vmem>>, vector<8x128xf32>
    tpu.vector_store %arg12[%c0_53, %c128], %68 {strides = array<i32>} : memref<8x512xf32, #tpu.memory_space<vmem>>, vector<8x128xf32>,
    %c0_54 = arith.constant 0 : index
    %c256 = arith.constant 256 : index
    %139 = vector.load %arg12[%c0_54, %c256] : memref<8x512xf32, #tpu.memory_space<vmem>>, vector<8x128xf32>
    tpu.vector_store %arg12[%c0_54, %c256], %34 {strides = array<i32>} : memref<8x512xf32, #tpu.memory_space<vmem>>, vector<8x128xf32>,
    %c0_55 = arith.constant 0 : index
    %c384 = arith.constant 384 : index
    %140 = vector.load %arg12[%c0_55, %c384] : memref<8x512xf32, #tpu.memory_space<vmem>>, vector<8x128xf32>
    tpu.vector_store %arg12[%c0_55, %c384], %66 {strides = array<i32>} : memref<8x512xf32, #tpu.memory_space<vmem>>, vector<8x128xf32>,
    return
  }
  func.func @transform_0(%arg0: i32) -> i32 {
    %c0_i32 = arith.constant 0 : i32
    %c0_i32_0 = arith.constant 0 : i32
    return %c0_i32 : i32
  }
  func.func @transform_1(%arg0: i32) -> (i32, i32) {
    %c0_i32 = arith.constant 0 : i32
    %c0_i32_0 = arith.constant 0 : i32
    return %arg0, %c0_i32 : i32, i32
  }
  func.func @transform_2(%arg0: i32) -> (i32, i32) {
    %c0_i32 = arith.constant 0 : i32
    %c0_i32_0 = arith.constant 0 : i32
    return %arg0, %c0_i32 : i32, i32
  }
  func.func @transform_3(%arg0: i32) -> (i32, i32) {
    %c0_i32 = arith.constant 0 : i32
    %c0_i32_0 = arith.constant 0 : i32
    %c0_i32_1 = arith.constant 0 : i32
    return %c0_i32, %c0_i32_0 : i32, i32
  }
  func.func @transform_4(%arg0: i32) -> (i32, i32) {
    %c0_i32 = arith.constant 0 : i32
    %c0_i32_0 = arith.constant 0 : i32
    %c0_i32_1 = arith.constant 0 : i32
    return %c0_i32, %c0_i32_0 : i32, i32
  }
  func.func @transform_5(%arg0: i32) -> (i32, i32) {
    %c0_i32 = arith.constant 0 : i32
    %c0_i32_0 = arith.constant 0 : i32
    %c0_i32_1 = arith.constant 0 : i32
    return %c0_i32, %c0_i32_0 : i32, i32
  }
  func.func @transform_6(%arg0: i32) -> (i32, i32) {
    %c0_i32 = arith.constant 0 : i32
    %c0_i32_0 = arith.constant 0 : i32
    %c0_i32_1 = arith.constant 0 : i32
    return %c0_i32, %c0_i32_0 : i32, i32
  }
  func.func @transform_7(%arg0: i32) -> (i32, i32) {
    %c0_i32 = arith.constant 0 : i32
    %c0_i32_0 = arith.constant 0 : i32
    %c0_i32_1 = arith.constant 0 : i32
    return %c0_i32, %c0_i32_0 : i32, i32
  }
  func.func @transform_8(%arg0: i32) -> (i32, i32) {
    %c0_i32 = arith.constant 0 : i32
    %c0_i32_0 = arith.constant 0 : i32
    %c0_i32_1 = arith.constant 0 : i32
    return %c0_i32, %c0_i32_0 : i32, i32
  }
  func.func @transform_9(%arg0: i32) -> (i32, i32) {
    %c0_i32 = arith.constant 0 : i32
    %c0_i32_0 = arith.constant 0 : i32
    %c0_i32_1 = arith.constant 0 : i32
    return %c0_i32, %c0_i32_0 : i32, i32
  }
  func.func @transform_10(%arg0: i32) -> (i32, i32) {
    %c0_i32 = arith.constant 0 : i32
    %c0_i32_0 = arith.constant 0 : i32
    %c0_i32_1 = arith.constant 0 : i32
    return %c0_i32, %c0_i32_0 : i32, i32
  }
  func.func @transform_11(%arg0: i32) -> (i32, i32) {
    %c0_i32 = arith.constant 0 : i32
    %c0_i32_0 = arith.constant 0 : i32
    return %arg0, %c0_i32 : i32, i32
  }
}

</mosaic_0001>

<llo_original>
// kernel: custom_vae_decoder.1
$region0: #{custom_vae_decoder.1}
  #allocation0 [shape = 'u32[]', space=smem, size = 0x4, offset = 0x4, fixed_abs, tag = 'smem constant byte address 0x4 - core index']
  #allocation1 [shape = 'u32[72,128]{1,0:T(1,128)}', space=vmem, size = 0x9000, scoped, tag = 'internal scratch']
  #allocation2 [shape = 'f32[1]{0:T(128)S(6)}', space=smem, size = 0x200, scoped, tag = 'scoped memory for custom_vae_decoder.1']
  %s0 = inlined_call_operand.<no memory space> [shape: f32[1], index: 0, kind: input, shape index: {}]
  %s1 = inlined_call_operand.vmem [shape: bf16[8,128], index: 1, kind: input, shape index: {}]
  %s2 = inlined_call_operand.vmem [shape: bf16[8,128], index: 2, kind: input, shape index: {}]
  %s3 = inlined_call_operand.hbm [shape: bf16[128,256], index: 3, kind: input, shape index: {}]
  %s4 = inlined_call_operand.vmem [shape: f32[1,256], index: 4, kind: input, shape index: {}]
  %s5 = inlined_call_operand.hbm [shape: bf16[128,128], index: 5, kind: input, shape index: {}]
  %s6 = inlined_call_operand.vmem [shape: f32[1,128], index: 6, kind: input, shape index: {}]
  %s7 = inlined_call_operand.hbm [shape: bf16[128,128], index: 7, kind: input, shape index: {}]
  %s8 = inlined_call_operand.vmem [shape: f32[1,128], index: 8, kind: input, shape index: {}]
  %s9 = inlined_call_operand.hbm [shape: bf16[128,128], index: 9, kind: input, shape index: {}]
  %s10 = inlined_call_operand.vmem [shape: f32[1,128], index: 10, kind: input, shape index: {}]
  %s11 = inlined_call_operand.vmem [shape: f32[8,512], index: 11, kind: output, shape index: {}]
  %s12 = sld [smem:[#allocation0]]
  $region70: #{custom_vae_decoder.1} parent=0
    _
  %s14 = ssub.s32 1, %s12
  %s15 = scalar_select 0, %s14, %s12
  %16 = sst [smem:[#allocation2]] %s0
  $region1: #{custom_vae_decoder.1} parent=0
    #allocation3 [shape = 'u8[65536]{0}', space=vmem, size = 0x10000, scoped, tag = 'input window, operand 3, single buffered']
    #allocation4 [shape = 's32[1]{0}', space=sflag, size = 0x4, scoped, tag = 'scoped memory for custom_vae_decoder.1']
    #allocation5 [shape = 'u8[32768]{0}', space=vmem, size = 0x8000, scoped, tag = 'input window, operand 5, single buffered']
    #allocation6 [shape = 's32[1]{0}', space=sflag, size = 0x4, scoped, tag = 'scoped memory for custom_vae_decoder.1']
    #allocation7 [shape = 'u8[32768]{0}', space=vmem, size = 0x8000, scoped, tag = 'input window, operand 7, single buffered']
    #allocation8 [shape = 'u8[32768]{0}', space=vmem, size = 0x8000, scoped, tag = 'input window, operand 9, single buffered']
    #allocation9 [shape = 's32[1]{0}', space=sflag, size = 0x4, scoped, tag = 'scoped memory for custom_vae_decoder.1']
    %17 = vsyncpa [#allocation4], 0
    %18 = vsyncpa [#allocation6], 0
    %19 = vsyncpa [#allocation9], 0
    // Predicated region
    $region2: #{custom_vae_decoder.1} parent=1 // pred_check
      _
    $region3: #{custom_vae_decoder.1} parent=1 // pred_check_branch
      %21 = sbr.rel (0) target = $region5
    $region4: #{custom_vae_decoder.1} parent=1 // pred_region
      _
    $region5: #{custom_vae_decoder.1} parent=1 // pred_fallthru
      _
    // Predicated region
    $region6: #{custom_vae_decoder.1} parent=1 // pred_check
      _
    $region7: #{custom_vae_decoder.1} parent=1 // pred_check_branch
      %23 = sbr.rel (0) target = $region9
    $region8: #{custom_vae_decoder.1} parent=1 // pred_region
      _
    $region9: #{custom_vae_decoder.1} parent=1 // pred_fallthru
      _
    // Predicated region
    $region10: #{custom_vae_decoder.1} parent=1 // pred_check
      _
    $region11: #{custom_vae_decoder.1} parent=1 // pred_check_branch
      %25 = sbr.rel (0) target = $region13
    $region12: #{custom_vae_decoder.1} parent=1 // pred_region
      _
    $region13: #{custom_vae_decoder.1} parent=1 // pred_fallthru
      _
    // Predicated region
    $region14: #{custom_vae_decoder.1} parent=1 // pred_check
      _
    $region15: #{custom_vae_decoder.1} parent=1 // pred_check_branch
      %27 = sbr.rel (0) target = $region17
    $region16: #{custom_vae_decoder.1} parent=1 // pred_region
      %29 = vsyncadd [#allocation4], 0
      %s30 = sshll.u32 %s3, 4
      %s31 = int_to_ptr.hbm [resolvable:$true] %s30
      %s32 = sshll.u32 [#allocation3], 4
      %s33 = int_to_ptr.vmem [resolvable:$true] %s32
      %38 = dma.hbm_to_vmem [thread:$0]  %s31, 2048, %s33, [#allocation4], 128, 128, 8
    $region17: #{custom_vae_decoder.1} parent=1 // pred_fallthru
      _
    // Predicated region
    $region18: #{custom_vae_decoder.1} parent=1 // pred_check
      _
    $region19: #{custom_vae_decoder.1} parent=1 // pred_check_branch
      %40 = sbr.rel (0) target = $region21
    $region20: #{custom_vae_decoder.1} parent=1 // pred_region
      _
    $region21: #{custom_vae_decoder.1} parent=1 // pred_fallthru
      _
    // Predicated region
    $region22: #{custom_vae_decoder.1} parent=1 // pred_check
      _
    $region23: #{custom_vae_decoder.1} parent=1 // pred_check_branch
      %42 = sbr.rel (0) target = $region25
    $region24: #{custom_vae_decoder.1} parent=1 // pred_region
      %44 = vsyncadd [#allocation6], 0
      %s45 = sshll.u32 %s5, 4
      %s46 = int_to_ptr.hbm [resolvable:$true] %s45
      %s47 = sshll.u32 [#allocation5], 4
      %s48 = int_to_ptr.vmem [resolvable:$true] %s47
      %53 = dma.hbm_to_vmem [thread:$0]  %s46, 1024, %s48, [#allocation6], 64, 64, 4
    $region25: #{custom_vae_decoder.1} parent=1 // pred_fallthru
      _
    // Predicated region
    $region26: #{custom_vae_decoder.1} parent=1 // pred_check
      _
    $region27: #{custom_vae_decoder.1} parent=1 // pred_check_branch
      %55 = sbr.rel (0) target = $region29
    $region28: #{custom_vae_decoder.1} parent=1 // pred_region
      _
    $region29: #{custom_vae_decoder.1} parent=1 // pred_fallthru
      _
    // Predicated region
    $region30: #{custom_vae_decoder.1} parent=1 // pred_check
      _
    $region31: #{custom_vae_decoder.1} parent=1 // pred_check_branch
      %57 = sbr.rel (0) target = $region33
    $region32: #{custom_vae_decoder.1} parent=1 // pred_region
      %59 = vsyncadd [#allocation6], 0
      %s60 = sshll.u32 %s7, 4
      %s61 = int_to_ptr.hbm [resolvable:$true] %s60
      %s62 = sshll.u32 [#allocation7], 4
      %s63 = int_to_ptr.vmem [resolvable:$true] %s62
      %68 = dma.hbm_to_vmem [thread:$0]  %s61, 1024, %s63, [#allocation6], 64, 64, 4
    $region33: #{custom_vae_decoder.1} parent=1 // pred_fallthru
      _
    // Predicated region
    $region34: #{custom_vae_decoder.1} parent=1 // pred_check
      _
    $region35: #{custom_vae_decoder.1} parent=1 // pred_check_branch
      %70 = sbr.rel (0) target = $region37
    $region36: #{custom_vae_decoder.1} parent=1 // pred_region
      _
    $region37: #{custom_vae_decoder.1} parent=1 // pred_fallthru
      _
    // Predicated region
    $region38: #{custom_vae_decoder.1} parent=1 // pred_check
      _
    $region39: #{custom_vae_decoder.1} parent=1 // pred_check_branch
      %72 = sbr.rel (0) target = $region41
    $region40: #{custom_vae_decoder.1} parent=1 // pred_region
      %74 = vsyncadd [#allocation9], 0
      %s75 = sshll.u32 %s9, 4
      %s76 = int_to_ptr.hbm [resolvable:$true] %s75
      %s77 = sshll.u32 [#allocation8], 4
      %s78 = int_to_ptr.vmem [resolvable:$true] %s77
      %83 = dma.hbm_to_vmem [thread:$0]  %s76, 1024, %s78, [#allocation9], 64, 64, 4
    $region41: #{custom_vae_decoder.1} parent=1 // pred_fallthru
      _
    // Predicated region
    $region42: #{custom_vae_decoder.1} parent=1 // pred_check
      _
    $region43: #{custom_vae_decoder.1} parent=1 // pred_check_branch
      %85 = sbr.rel (0) target = $region45
    $region44: #{custom_vae_decoder.1} parent=1 // pred_region
      _
    $region45: #{custom_vae_decoder.1} parent=1 // pred_fallthru
      _
    // Predicated region
    $region46: #{custom_vae_decoder.1} parent=1 // pred_check
      _
    $region47: #{custom_vae_decoder.1} parent=1 // pred_check_branch
      %87 = sbr.rel (0) target = $region49
    $region48: #{custom_vae_decoder.1} parent=1 // pred_region
      %89 = dma.done [#allocation4], 2048
    $region49: #{custom_vae_decoder.1} parent=1 // pred_fallthru
      _
    // Predicated region
    $region50: #{custom_vae_decoder.1} parent=1 // pred_check
      _
    $region51: #{custom_vae_decoder.1} parent=1 // pred_check_branch
      %91 = sbr.rel (0) target = $region53
    $region52: #{custom_vae_decoder.1} parent=1 // pred_region
      %93 = dma.done [#allocation6], 1024
    $region53: #{custom_vae_decoder.1} parent=1 // pred_fallthru
      _
    // Predicated region
    $region54: #{custom_vae_decoder.1} parent=1 // pred_check
      _
    $region55: #{custom_vae_decoder.1} parent=1 // pred_check_branch
      %95 = sbr.rel (0) target = $region57
    $region56: #{custom_vae_decoder.1} parent=1 // pred_region
      %97 = dma.done [#allocation6], 1024
    $region57: #{custom_vae_decoder.1} parent=1 // pred_fallthru
      _
    // Predicated region
    $region58: #{custom_vae_decoder.1} parent=1 // pred_check
      _
    $region59: #{custom_vae_decoder.1} parent=1 // pred_check_branch
      %99 = sbr.rel (0) target = $region61
    $region60: #{custom_vae_decoder.1} parent=1 // pred_region
      %101 = dma.done [#allocation9], 1024
    $region61: #{custom_vae_decoder.1} parent=1 // pred_fallthru
      _
    %s102 = sld [smem:[#allocation2]]
    %v103 = vld [vmem:[%s1] sm:$0xf]
    %v104 = vld [vmem:[%s2] sm:$0xf]
    %v105 = vunpack.c.l.bf16 %v104
    %v106 = vld [vmem:[#allocation3] sm:$0xff]
    %v107 = vld [vmem:[#allocation3 + $0x8] sm:$0xff]
    %v108 = vld [vmem:[#allocation3 + $0x10] sm:$0xff]
    %v109 = vld [vmem:[#allocation3 + $0x18] sm:$0xff]
    %v110 = vld [vmem:[#allocation3 + $0x20] sm:$0xff]
    %v111 = vld [vmem:[#allocation3 + $0x28] sm:$0xff]
    %v112 = vld [vmem:[#allocation3 + $0x30] sm:$0xff]
    %v113 = vld [vmem:[#allocation3 + $0x38] sm:$0xff]
    %v114 = vld [vmem:[#allocation3 + $0x40] sm:$0xff]
    %v115 = vld [vmem:[#allocation3 + $0x48] sm:$0xff]
    %v116 = vld [vmem:[#allocation3 + $0x50] sm:$0xff]
    %v117 = vld [vmem:[#allocation3 + $0x58] sm:$0xff]
    %v118 = vld [vmem:[#allocation3 + $0x60] sm:$0xff]
    %v119 = vld [vmem:[#allocation3 + $0x68] sm:$0xff]
    %v120 = vld [vmem:[#allocation3 + $0x70] sm:$0xff]
    %v121 = vld [vmem:[#allocation3 + $0x78] sm:$0xff]
    %v122 = vld [vmem:[%s4] sm:$0x3]
    %v124 = vperm.slane %v122, 0
    %v125 = vperm.slane %v122, 1
    %v144 = vunpack.c.l.b16 %v106
    %v145 = vunpack.c.h.b16 %v106
    %v146 = vunpack.c.l.b16 %v107
    %v147 = vunpack.c.h.b16 %v107
    %v148 = vunpack.c.l.b16 %v108
    %v149 = vunpack.c.h.b16 %v108
    %v150 = vunpack.c.l.b16 %v109
    %v151 = vunpack.c.h.b16 %v109
    %v152 = vunpack.c.l.b16 %v110
    %v153 = vunpack.c.h.b16 %v110
    %v154 = vunpack.c.l.b16 %v111
    %v155 = vunpack.c.h.b16 %v111
    %v156 = vunpack.c.l.b16 %v112
    %v157 = vunpack.c.h.b16 %v112
    %v158 = vunpack.c.l.b16 %v113
    %v159 = vunpack.c.h.b16 %v113
    %v160 = vunpack.c.l.b16 %v114
    %v161 = vunpack.c.h.b16 %v114
    %v162 = vunpack.c.l.b16 %v115
    %v163 = vunpack.c.h.b16 %v115
    %v164 = vunpack.c.l.b16 %v116
    %v165 = vunpack.c.h.b16 %v116
    %v166 = vunpack.c.l.b16 %v117
    %v167 = vunpack.c.h.b16 %v117
    %v168 = vunpack.c.l.b16 %v118
    %v169 = vunpack.c.h.b16 %v118
    %v170 = vunpack.c.l.b16 %v119
    %v171 = vunpack.c.h.b16 %v119
    %v172 = vunpack.c.l.b16 %v120
    %v173 = vunpack.c.h.b16 %v120
    %v174 = vunpack.c.l.b16 %v121
    %v175 = vunpack.c.h.b16 %v121
    %v176 = vpack.c.b16 %v146, %v144
    %v177 = vpack.c.b16 %v147, %v145
    %v178 = vpack.c.b16 %v150, %v148
    %v179 = vpack.c.b16 %v151, %v149
    %v180 = vpack.c.b16 %v154, %v152
    %v181 = vpack.c.b16 %v155, %v153
    %v182 = vpack.c.b16 %v158, %v156
    %v183 = vpack.c.b16 %v159, %v157
    %v184 = vpack.c.b16 %v162, %v160
    %v185 = vpack.c.b16 %v163, %v161
    %v186 = vpack.c.b16 %v166, %v164
    %v187 = vpack.c.b16 %v167, %v165
    %v188 = vpack.c.b16 %v170, %v168
    %v189 = vpack.c.b16 %v171, %v169
    %v190 = vpack.c.b16 %v174, %v172
    %v191 = vpack.c.b16 %v175, %v173
    %208 = vmatpush.bf16.msra.mxu0 %v190
    %209 = vmatpush.bf16.msra.mxu0 %v188
    %210 = vmatpush.bf16.msra.mxu0 %v186
    %211 = vmatpush.bf16.msra.mxu0 %v184
    %212 = vmatpush.bf16.msra.mxu0 %v182
    %213 = vmatpush.bf16.msra.mxu0 %v180
    %214 = vmatpush.bf16.msra.mxu0 %v178
    %215 = vmatpush.bf16.msra.mxu0 %v176
    %216 = vmatmul.bf16.gmra.mxu0 %v103
    %v217 = vpop.f32.mrf.mxu0
    %v218 = vadd.f32 %v124, %v217
    %v219 = vpop.f32.mrf.mxu0
    %220 = vdwg.mxu0
    %221 = vmatpush.bf16.msra.mxu0 %v191
    %222 = vmatpush.bf16.msra.mxu0 %v189
    %223 = vmatpush.bf16.msra.mxu0 %v187
    %224 = vmatpush.bf16.msra.mxu0 %v185
    %225 = vmatpush.bf16.msra.mxu0 %v183
    %226 = vmatpush.bf16.msra.mxu0 %v181
    %227 = vmatpush.bf16.msra.mxu0 %v179
    %228 = vmatpush.bf16.msra.mxu0 %v177
    %229 = vmatmul.bf16.gmra.mxu0 %v103
    %v230 = vpop.f32.mrf.mxu0
    %v231 = vadd.f32 %v125, %v230
    %v232 = vpop.f32.mrf.mxu0
    %233 = vdwg.mxu0
    %234 = vadd.xlane.f32.xlu0 %v218
    %v235 = vpop.xlane.xlu0 %234
    %v236 = vmul.f32 %v235, 0.03125
    %v237 = vsub.f32 %v218, %v236
    %v238 = vlaneseq
    %v239 = vand.u32 %v238, 127
    %vm240 = vcmp.lt.s32.totalorder %v239, 32
    %v241 = vsel %vm240, 1, 0
    %v242 = vcvt.s32.f32 %v241
    %v243 = vmul.f32 %v237, %v242
    %v244 = vmul.f32 %v243, %v243
    %245 = vadd.xlane.f32.xlu0 %v244
    %v246 = vpop.xlane.xlu0 %245
    %v247 = vmul.f32 %v246, 0.03125
    %v248 = vadd.f32 %v247, 1e-05
    %v249 = vrsqrt.pop %v248
    %v250 = vmul.f32 %v249, %v248
    %v251 = vmul.f32 %v250, %v249
    %v252 = vmul.f32 0.5, %v251
    %v253 = vsub.f32 1.5, %v252
    %v254 = vmul.f32 %v249, %v253
    %vm255 = vweird.f32 %v248
    %vm256 = vweird.f32 %v249
    %vm257 = vmor %vm255, %vm256
    %v258 = vsel %vm257, %v249, %v254
    %v259 = vmul.f32 %v243, %v258
    %v260 = vmax.f32 %v259, 0.0
    %261 = vadd.xlane.f32.xlu0 %v231
    %v262 = vpop.xlane.xlu0 %261
    %v263 = vmul.f32 %v262, 0.03125
    %v264 = vsub.f32 %v231, %v263
    %v265 = vmul.f32 %v264, %v242
    %v266 = vmul.f32 %v265, %v265
    %267 = vadd.xlane.f32.xlu0 %v266
    %v268 = vpop.xlane.xlu0 %267
    %v269 = vmul.f32 %v268, 0.03125
    %v270 = vadd.f32 %v269, 1e-05
    %v271 = vrsqrt.pop %v270
    %v272 = vmul.f32 %v271, %v270
    %v273 = vmul.f32 %v272, %v271
    %v274 = vmul.f32 0.5, %v273
    %v275 = vsub.f32 1.5, %v274
    %v276 = vmul.f32 %v271, %v275
    %vm277 = vweird.f32 %v270
    %vm278 = vweird.f32 %v271
    %vm279 = vmor %vm277, %vm278
    %v280 = vsel %vm279, %v271, %v276
    %v281 = vmul.f32 %v265, %v280
    %v282 = vmax.f32 %v281, 0.0
    %v283 = vmul.f32 %v282, 1.442695
    %v284 = vpow.pop %v283
    %v285 = vadd.f32 %v284, 0.0001
    %v286 = vrsqrt.pop %v285
    %v287 = vmul.f32 %v286, %v285
    %v288 = vmul.f32 %v287, %v286
    %v289 = vmul.f32 0.5, %v288
    %v290 = vsub.f32 1.5, %v289
    %v291 = vmul.f32 %v286, %v290
    %v292 = vmul.f32 %v285, %v291
    %vm293 = vcmp.eq.f32.partialorder %v285, inf
    %v294 = vsel %vm293, %v285, %v292
    %vm295 = vcmp.eq.f32.partialorder %v285, 0.0
    %v296 = vand.u32 %v285, 2147483648
    %v297 = vsel %vm295, %v296, %v294
    %v298 = vstv %s102
    %v299 = vmul.f32 %v298, %v297
    %v300 = vmul.f32 %v299, %v105
    %v301 = vadd.f32 %v260, %v300
    %v302 = vpack.c.bf16 %v301, %v301
    %v303 = vld [vmem:[#allocation5] sm:$0xf]
    %v304 = vld [vmem:[#allocation5 + $0x4] sm:$0xf]
    %v305 = vld [vmem:[#allocation5 + $0x8] sm:$0xf]
    %v306 = vld [vmem:[#allocation5 + $0xc] sm:$0xf]
    %v307 = vld [vmem:[#allocation5 + $0x10] sm:$0xf]
    %v308 = vld [vmem:[#allocation5 + $0x14] sm:$0xf]
    %v309 = vld [vmem:[#allocation5 + $0x18] sm:$0xf]
    %v310 = vld [vmem:[#allocation5 + $0x1c] sm:$0xf]
    %v311 = vld [vmem:[#allocation5 + $0x20] sm:$0xf]
    %v312 = vld [vmem:[#allocation5 + $0x24] sm:$0xf]
    %v313 = vld [vmem:[#allocation5 + $0x28] sm:$0xf]
    %v314 = vld [vmem:[#allocation5 + $0x2c] sm:$0xf]
    %v315 = vld [vmem:[#allocation5 + $0x30] sm:$0xf]
    %v316 = vld [vmem:[#allocation5 + $0x34] sm:$0xf]
    %v317 = vld [vmem:[#allocation5 + $0x38] sm:$0xf]
    %v318 = vld [vmem:[#allocation5 + $0x3c] sm:$0xf]
    %v319 = vld [vmem:[%s6] sm:$0x1]
    %v321 = vperm.slane %v319, 0
    %v339 = vunpack.c.l.b16 %v303
    %v340 = vunpack.c.l.b16 %v304
    %v341 = vunpack.c.l.b16 %v305
    %v342 = vunpack.c.l.b16 %v306
    %v343 = vunpack.c.l.b16 %v307
    %v344 = vunpack.c.l.b16 %v308
    %v345 = vunpack.c.l.b16 %v309
    %v346 = vunpack.c.l.b16 %v310
    %v347 = vunpack.c.l.b16 %v311
    %v348 = vunpack.c.l.b16 %v312
    %v349 = vunpack.c.l.b16 %v313
    %v350 = vunpack.c.l.b16 %v314
    %v351 = vunpack.c.l.b16 %v315
    %v352 = vunpack.c.l.b16 %v316
    %v353 = vunpack.c.l.b16 %v317
    %v354 = vunpack.c.l.b16 %v318
    %v355 = vpack.c.b16 %v340, %v339
    %v356 = vpack.c.b16 %v342, %v341
    %v357 = vpack.c.b16 %v344, %v343
    %v358 = vpack.c.b16 %v346, %v345
    %v359 = vpack.c.b16 %v348, %v347
    %v360 = vpack.c.b16 %v350, %v349
    %v361 = vpack.c.b16 %v352, %v351
    %v362 = vpack.c.b16 %v354, %v353
    %371 = vmatpush.bf16.msra.mxu0 %v362
    %372 = vmatpush.bf16.msra.mxu0 %v361
    %373 = vmatpush.bf16.msra.mxu0 %v360
    %374 = vmatpush.bf16.msra.mxu0 %v359
    %375 = vmatpush.bf16.msra.mxu0 %v358
    %376 = vmatpush.bf16.msra.mxu0 %v357
    %377 = vmatpush.bf16.msra.mxu0 %v356
    %378 = vmatpush.bf16.msra.mxu0 %v355
    %379 = vmatmul.bf16.gmra.mxu0 %v302
    %v380 = vpop.f32.mrf.mxu0
    %v381 = vadd.f32 %v321, %v380
    %v382 = vpop.f32.mrf.mxu0
    %383 = vdwg.mxu0
    %384 = vadd.xlane.f32.xlu0 %v381
    %v385 = vpop.xlane.xlu0 %384
    %v386 = vmul.f32 %v385, 0.03125
    %v387 = vsub.f32 %v381, %v386
    %v388 = vmul.f32 %v387, %v242
    %v389 = vmul.f32 %v388, %v388
    %390 = vadd.xlane.f32.xlu0 %v389
    %v391 = vpop.xlane.xlu0 %390
    %v392 = vmul.f32 %v391, 0.03125
    %v393 = vadd.f32 %v392, 1e-05
    %v394 = vrsqrt.pop %v393
    %v395 = vmul.f32 %v394, %v393
    %v396 = vmul.f32 %v395, %v394
    %v397 = vmul.f32 0.5, %v396
    %v398 = vsub.f32 1.5, %v397
    %v399 = vmul.f32 %v394, %v398
    %vm400 = vweird.f32 %v393
    %vm401 = vweird.f32 %v394
    %vm402 = vmor %vm400, %vm401
    %v403 = vsel %vm402, %v394, %v399
    %v404 = vmul.f32 %v388, %v403
    %v405 = vmax.f32 %v404, 0.0
    %v406 = vpack.c.bf16 %v405, %v405
    %v407 = vld [vmem:[#allocation7] sm:$0xf]
    %v408 = vld [vmem:[#allocation7 + $0x4] sm:$0xf]
    %v409 = vld [vmem:[#allocation7 + $0x8] sm:$0xf]
    %v410 = vld [vmem:[#allocation7 + $0xc] sm:$0xf]
    %v411 = vld [vmem:[#allocation7 + $0x10] sm:$0xf]
    %v412 = vld [vmem:[#allocation7 + $0x14] sm:$0xf]
    %v413 = vld [vmem:[#allocation7 + $0x18] sm:$0xf]
    %v414 = vld [vmem:[#allocation7 + $0x1c] sm:$0xf]
    %v415 = vld [vmem:[#allocation7 + $0x20] sm:$0xf]
    %v416 = vld [vmem:[#allocation7 + $0x24] sm:$0xf]
    %v417 = vld [vmem:[#allocation7 + $0x28] sm:$0xf]
    %v418 = vld [vmem:[#allocation7 + $0x2c] sm:$0xf]
    %v419 = vld [vmem:[#allocation7 + $0x30] sm:$0xf]
    %v420 = vld [vmem:[#allocation7 + $0x34] sm:$0xf]
    %v421 = vld [vmem:[#allocation7 + $0x38] sm:$0xf]
    %v422 = vld [vmem:[#allocation7 + $0x3c] sm:$0xf]
    %v423 = vld [vmem:[%s8] sm:$0x1]
    %v425 = vperm.slane %v423, 0
    %v443 = vunpack.c.l.b16 %v407
    %v444 = vunpack.c.l.b16 %v408
    %v445 = vunpack.c.l.b16 %v409
    %v446 = vunpack.c.l.b16 %v410
    %v447 = vunpack.c.l.b16 %v411
    %v448 = vunpack.c.l.b16 %v412
    %v449 = vunpack.c.l.b16 %v413
    %v450 = vunpack.c.l.b16 %v414
    %v451 = vunpack.c.l.b16 %v415
    %v452 = vunpack.c.l.b16 %v416
    %v453 = vunpack.c.l.b16 %v417
    %v454 = vunpack.c.l.b16 %v418
    %v455 = vunpack.c.l.b16 %v419
    %v456 = vunpack.c.l.b16 %v420
    %v457 = vunpack.c.l.b16 %v421
    %v458 = vunpack.c.l.b16 %v422
    %v459 = vpack.c.b16 %v444, %v443
    %v460 = vpack.c.b16 %v446, %v445
    %v461 = vpack.c.b16 %v448, %v447
    %v462 = vpack.c.b16 %v450, %v449
    %v463 = vpack.c.b16 %v452, %v451
    %v464 = vpack.c.b16 %v454, %v453
    %v465 = vpack.c.b16 %v456, %v455
    %v466 = vpack.c.b16 %v458, %v457
    %475 = vmatpush.bf16.msra.mxu0 %v466
    %476 = vmatpush.bf16.msra.mxu0 %v465
    %477 = vmatpush.bf16.msra.mxu0 %v464
    %478 = vmatpush.bf16.msra.mxu0 %v463
    %479 = vmatpush.bf16.msra.mxu0 %v462
    %480 = vmatpush.bf16.msra.mxu0 %v461
    %481 = vmatpush.bf16.msra.mxu0 %v460
    %482 = vmatpush.bf16.msra.mxu0 %v459
    %483 = vmatmul.bf16.gmra.mxu0 %v406
    %v484 = vpop.f32.mrf.mxu0
    %v485 = vadd.f32 %v425, %v484
    %v486 = vpop.f32.mrf.mxu0
    %487 = vdwg.mxu0
    %488 = vadd.xlane.f32.xlu0 %v485
    %v489 = vpop.xlane.xlu0 %488
    %v490 = vmul.f32 %v489, 0.03125
    %v491 = vsub.f32 %v485, %v490
    %v492 = vmul.f32 %v491, %v242
    %v493 = vmul.f32 %v492, %v492
    %494 = vadd.xlane.f32.xlu0 %v493
    %v495 = vpop.xlane.xlu0 %494
    %v496 = vmul.f32 %v495, 0.03125
    %v497 = vadd.f32 %v496, 1e-05
    %v498 = vrsqrt.pop %v497
    %v499 = vmul.f32 %v498, %v497
    %v500 = vmul.f32 %v499, %v498
    %v501 = vmul.f32 0.5, %v500
    %v502 = vsub.f32 1.5, %v501
    %v503 = vmul.f32 %v498, %v502
    %vm504 = vweird.f32 %v497
    %vm505 = vweird.f32 %v498
    %vm506 = vmor %vm504, %vm505
    %v507 = vsel %vm506, %v498, %v503
    %v508 = vmul.f32 %v492, %v507
    %v509 = vmax.f32 %v508, 0.0
    %v510 = vpack.c.bf16 %v509, %v509
    %v511 = vld [vmem:[#allocation8] sm:$0xf]
    %v512 = vld [vmem:[#allocation8 + $0x4] sm:$0xf]
    %v513 = vld [vmem:[#allocation8 + $0x8] sm:$0xf]
    %v514 = vld [vmem:[#allocation8 + $0xc] sm:$0xf]
    %v515 = vld [vmem:[#allocation8 + $0x10] sm:$0xf]
    %v516 = vld [vmem:[#allocation8 + $0x14] sm:$0xf]
    %v517 = vld [vmem:[#allocation8 + $0x18] sm:$0xf]
    %v518 = vld [vmem:[#allocation8 + $0x1c] sm:$0xf]
    %v519 = vld [vmem:[#allocation8 + $0x20] sm:$0xf]
    %v520 = vld [vmem:[#allocation8 + $0x24] sm:$0xf]
    %v521 = vld [vmem:[#allocation8 + $0x28] sm:$0xf]
    %v522 = vld [vmem:[#allocation8 + $0x2c] sm:$0xf]
    %v523 = vld [vmem:[#allocation8 + $0x30] sm:$0xf]
    %v524 = vld [vmem:[#allocation8 + $0x34] sm:$0xf]
    %v525 = vld [vmem:[#allocation8 + $0x38] sm:$0xf]
    %v526 = vld [vmem:[#allocation8 + $0x3c] sm:$0xf]
    %v527 = vld [vmem:[%s10] sm:$0x1]
    %v529 = vperm.slane %v527, 0
    %v547 = vunpack.c.l.b16 %v511
    %v548 = vunpack.c.l.b16 %v512
    %v549 = vunpack.c.l.b16 %v513
    %v550 = vunpack.c.l.b16 %v514
    %v551 = vunpack.c.l.b16 %v515
    %v552 = vunpack.c.l.b16 %v516
    %v553 = vunpack.c.l.b16 %v517
    %v554 = vunpack.c.l.b16 %v518
    %v555 = vunpack.c.l.b16 %v519
    %v556 = vunpack.c.l.b16 %v520
    %v557 = vunpack.c.l.b16 %v521
    %v558 = vunpack.c.l.b16 %v522
    %v559 = vunpack.c.l.b16 %v523
    %v560 = vunpack.c.l.b16 %v524
    %v561 = vunpack.c.l.b16 %v525
    %v562 = vunpack.c.l.b16 %v526
    %v563 = vpack.c.b16 %v548, %v547
    %v564 = vpack.c.b16 %v550, %v549
    %v565 = vpack.c.b16 %v552, %v551
    %v566 = vpack.c.b16 %v554, %v553
    %v567 = vpack.c.b16 %v556, %v555
    %v568 = vpack.c.b16 %v558, %v557
    %v569 = vpack.c.b16 %v560, %v559
    %v570 = vpack.c.b16 %v562, %v561
    %579 = vmatpush.bf16.msra.mxu0 %v570
    %580 = vmatpush.bf16.msra.mxu0 %v569
    %581 = vmatpush.bf16.msra.mxu0 %v568
    %582 = vmatpush.bf16.msra.mxu0 %v567
    %583 = vmatpush.bf16.msra.mxu0 %v566
    %584 = vmatpush.bf16.msra.mxu0 %v565
    %585 = vmatpush.bf16.msra.mxu0 %v564
    %586 = vmatpush.bf16.msra.mxu0 %v563
    %587 = vmatmul.bf16.gmra.mxu0 %v510
    %v588 = vpop.f32.mrf.mxu0
    %v589 = vadd.f32 %v529, %v588
    %v590 = vpop.f32.mrf.mxu0
    %591 = vdwg.mxu0
    %592 = vst [vmem:[%s11] sm:$0xff] %v589
    %593 = vst [vmem:[%s11 + $0x8] sm:$0xff] %v301
    %594 = vst [vmem:[%s11 + $0x10] sm:$0xff] %v260
    %595 = vst [vmem:[%s11 + $0x18] sm:$0xff] %v299
    // Predicated region
    $region62: #{custom_vae_decoder.1} parent=1 // pred_check
      _
    $region63: #{custom_vae_decoder.1} parent=1 // pred_check_branch
      %597 = sbr.rel (0) target = $region65
    $region64: #{custom_vae_decoder.1} parent=1 // pred_region
      _
    $region65: #{custom_vae_decoder.1} parent=1 // pred_fallthru
      _
    // Predicated region
    $region66: #{custom_vae_decoder.1} parent=1 // pred_check
      _
    $region67: #{custom_vae_decoder.1} parent=1 // pred_check_branch
      %599 = sbr.rel (0) target = $region69
    $region68: #{custom_vae_decoder.1} parent=1 // pred_region
      _
    $region69: #{custom_vae_decoder.1} parent=1 // pred_fallthru
      _
    %600 = vsyncpa [#allocation4], 1
    %601 = vsyncpa [#allocation6], 1
    %602 = vsyncpa [#allocation9], 1

</llo_original>
